<compile_context>
chip_gen: v7x
topology: tpu7x:2x2x1
jax: 0.10.0
libtpu: 0.0.40
codegen_flags: <defaults>
</compile_context>

<pallas_src>
import functools

import jax
import jax.numpy as jnp
from jax.experimental import pallas as pl
from jax.experimental.pallas import tpu as pltpu

LANE = 128
SUBLANE = 8


def dqn_kernel(x_ref, w1_ref, w23_ref, b_ref, out_ref, *, hidden, compute_dtype):
    x = x_ref[...]
    w1 = w1_ref[...]
    # Static, lane-aligned slices of the packed [hidden, hidden + out_pad] buffer.
    w2 = w23_ref[:, :hidden]
    w3 = w23_ref[:, hidden:]

    # fc1 + ReLU: MXU matmul with f32 accumulation; elementwise kept in f32.
    h1 = jnp.dot(x, w1, preferred_element_type=jnp.float32)
    h1 = jnp.maximum(h1 + b_ref[0:1, :hidden], 0.0)

    # fc2 + ReLU
    h2 = jnp.dot(h1.astype(compute_dtype), w2, preferred_element_type=jnp.float32)
    h2 = jnp.maximum(h2 + b_ref[1:2, :hidden], 0.0)

    # fc3 (no activation); out_pad is a multiple of 128 -> unmasked lane-dense store.
    o = jnp.dot(h2.astype(compute_dtype), w3, preferred_element_type=jnp.float32)
    out_ref[...] = (o + b_ref[2:3, :]).astype(out_ref.dtype)


def pack_params(params, *, use_bf16=True):
    """One-time packing/casting of parameters (keep out of the per-step forward).

    params: w1/w2/w3 stored as [in, out] (PyTorch weight transposed), b* as [1, out].
    """
    w1, b1, w2, b2, w3, b3 = (params["w1"], params["b1"], params["w2"],
                              params["b2"], params["w3"], params["b3"])
    in_dim, hidden = w1.shape
    out_dim = w3.shape[1]
    assert hidden % LANE == 0, "module uses hidden=128"
    out_pad = max(LANE, pl.cdiv(out_dim, LANE) * LANE)   # >= hidden here (hidden=128)

    compute_dtype = jnp.bfloat16 if use_bf16 else jnp.float32

    # Lane-dense output head: pad fc3 weight/bias with zero columns up to out_pad.
    w3p = jnp.pad(w3, ((0, 0), (0, out_pad - out_dim)))
    b3p = jnp.pad(b3, ((0, 0), (0, out_pad - out_dim)))

    # Pack fc2/fc3 weights into one VMEM-resident buffer, all biases into another.
    w23 = jnp.concatenate([w2, w3p], axis=1).astype(compute_dtype)
    biases = jnp.concatenate(
        [jnp.pad(b1, ((0, 0), (0, out_pad - hidden))),
         jnp.pad(b2, ((0, 0), (0, out_pad - hidden))),
         b3p], axis=0).astype(jnp.float32)
    w1c = w1.astype(compute_dtype)

    return dict(w1=w1c, w23=w23, b=biases,
                in_dim=int(in_dim), hidden=int(hidden),
                out_dim=int(out_dim), out_pad=int(out_pad),
                compute_dtype=compute_dtype)


def dqn_forward(x, packed, *, tb=512):
    """x: [B, input_dim] float32.  packed: output of pack_params."""
    w1c, w23, biases = packed["w1"], packed["w23"], packed["b"]
    in_dim, hidden = packed["in_dim"], packed["hidden"]
    out_dim, out_pad = packed["out_dim"], packed["out_pad"]
    compute_dtype = packed["compute_dtype"]

    B = x.shape[0]
    assert x.shape[1] == in_dim
    xc = x.astype(compute_dtype)

    # Batch tiling: TB rows per grid step (multiple of 8); weights stay resident.
    tb_cap = pl.cdiv(B, SUBLANE) * SUBLANE
    TB = max(SUBLANE, (min(tb, tb_cap) // SUBLANE) * SUBLANE)
    B_pad = pl.cdiv(B, TB) * TB
    if B_pad != B:
        xc = jnp.pad(xc, ((0, B_pad - B), (0, 0)))
    grid = (B_pad // TB,)

    itemsize = jnp.dtype(compute_dtype).itemsize
    flops = 2 * B_pad * (in_dim * hidden + hidden * hidden + hidden * out_pad)
    bytes_accessed = (B_pad * in_dim * itemsize                                      # x
                      + (in_dim * hidden + hidden * (hidden + out_pad)) * itemsize   # weights
                      + 3 * out_pad * 4                                              # biases
                      + B_pad * out_pad * 4)                                         # output

    out = pl.pallas_call(
        functools.partial(dqn_kernel, hidden=hidden, compute_dtype=compute_dtype),
        out_shape=jax.ShapeDtypeStruct((B_pad, out_pad), jnp.float32),
        grid=grid,
        in_specs=[
            pl.BlockSpec((TB, in_dim), lambda i: (i, 0)),                # streamed over batch
            pl.BlockSpec((in_dim, hidden), lambda i: (0, 0)),            # resident
            pl.BlockSpec((hidden, hidden + out_pad), lambda i: (0, 0)),  # resident
            pl.BlockSpec((3, out_pad), lambda i: (0, 0)),                # resident
        ],
        out_specs=pl.BlockSpec((TB, out_pad), lambda i: (i, 0)),
        compiler_params=pltpu.CompilerParams(
            dimension_semantics=("parallel",)),
        cost_estimate=pl.CostEstimate(flops=flops, transcendentals=0,
                                      bytes_accessed=bytes_accessed),
    )(xc, w1c, w23, biases)
    return out[:B, :out_dim]


def init_params(key, input_dim, output_dim, hidden=128):
    """Deterministic init mimicking nn.Linear default U(-1/sqrt(fan_in), 1/sqrt(fan_in))."""
    ks = jax.random.split(key, 6)

    def linear(kw, kb, fan_in, fan_out):
        bound = 1.0 / jnp.sqrt(jnp.float32(fan_in))
        w = jax.random.uniform(kw, (fan_in, fan_out), jnp.float32, -bound, bound)  # [in, out]
        b = jax.random.uniform(kb, (1, fan_out), jnp.float32, -bound, bound)
        return w, b

    w1, b1 = linear(ks[0], ks[1], input_dim, hidden)
    w2, b2 = linear(ks[2], ks[3], hidden, hidden)
    w3, b3 = linear(ks[4], ks[5], hidden, output_dim)
    return dict(w1=w1, b1=b1, w2=w2, b2=b2, w3=w3, b3=b3)


def dqn_reference(x, p, use_bf16=False):
    cdt = jnp.bfloat16 if use_bf16 else jnp.float32
    cast = lambda a: a.astype(cdt).astype(jnp.float32)
    h1 = jnp.maximum(cast(x) @ cast(p["w1"]) + p["b1"], 0.0)
    h2 = jnp.maximum(cast(h1) @ cast(p["w2"]) + p["b2"], 0.0)
    return cast(h2) @ cast(p["w3"]) + p["b3"]


if __name__ == "__main__":
    # Shapes consistent with the module: small obs dim, action dim, hidden=128.
    input_dim, output_dim, hidden = 16, 4, 128
    key = jax.random.PRNGKey(0)
    kx, kx2, kp = jax.random.split(key, 3)
    params = init_params(kp, input_dim, output_dim, hidden)

    # --- exact f32 path, small batch (single grid step) ---
    packed_f32 = pack_params(params, use_bf16=False)
    x_small = jax.random.normal(kx, (8, input_dim), jnp.float32)
    out_f32 = jax.block_until_ready(dqn_forward(x_small, packed_f32))
    ref_f32 = dqn_reference(x_small, params, use_bf16=False)
    assert out_f32.shape == (8, output_dim)
    assert jnp.allclose(out_f32, ref_f32, atol=1e-5, rtol=1e-5), "f32 mismatch vs reference"

    # --- bf16 fast path (v6e/v7x MXU-native) with f32 accumulation,
    #     larger batch exercising the batch grid (TB=64 -> 4 steps, padded rows) ---
    packed_bf16 = pack_params(params, use_bf16=True)
    x_big = jax.random.normal(kx2, (200, input_dim), jnp.float32)
    out_bf16 = jax.block_until_ready(dqn_forward(x_big, packed_bf16, tb=64))
    ref_bf16 = dqn_reference(x_big, params, use_bf16=True)
    assert out_bf16.shape == (200, output_dim)
    assert jnp.allclose(out_bf16, ref_bf16, atol=2e-2, rtol=2e-2), "bf16 mismatch vs reference"

    print("KERNEL_OK")
</pallas_src>

<mosaic_0001>
module attributes {stable_mosaic.version = 11 : i64} {
  func.func @dqn_kernel(%arg0: i32, %arg1: memref<8x16xf32, #tpu.memory_space<vmem>>, %arg2: memref<16x128xf32, #tpu.memory_space<vmem>>, %arg3: memref<128x256xf32, #tpu.memory_space<vmem>>, %arg4: memref<3x128xf32, #tpu.memory_space<vmem>>, %arg5: memref<8x128xf32, #tpu.memory_space<vmem>>) attributes {dimension_semantics = [#tpu.dimension_semantics<parallel>], iteration_bounds = array<i64: 1>, scalar_prefetch = 0 : i64, scratch_operands = 0 : i64, tpu.core_type = #tpu.core_type<tc>, window_params = [{transform_indices = @transform_0, window_bounds = array<i64: 8, 16>}, {pipeline_mode = #tpu.pipeline_mode<synchronous>, transform_indices = @transform_1, window_bounds = array<i64: 16, 128>}, {pipeline_mode = #tpu.pipeline_mode<synchronous>, transform_indices = @transform_2, window_bounds = array<i64: 128, 256>}, {pipeline_mode = #tpu.pipeline_mode<synchronous>, transform_indices = @transform_3, window_bounds = array<i64: 3, 128>}, {transform_indices = @transform_4, window_bounds = array<i64: 8, 128>}]} {
    %c0 = arith.constant 0 : index
    %c0_0 = arith.constant 0 : index
    %0 = vector.load %arg1[%c0, %c0_0] : memref<8x16xf32, #tpu.memory_space<vmem>>, vector<8x16xf32>
    %c0_1 = arith.constant 0 : index
    %c0_2 = arith.constant 0 : index
    %1 = vector.load %arg2[%c0_1, %c0_2] : memref<16x128xf32, #tpu.memory_space<vmem>>, vector<16x128xf32>
    %c0_3 = arith.constant 0 : index
    %c0_4 = arith.constant 0 : index
    %2 = vector.load %arg3[%c0_3, %c0_4] : memref<128x256xf32, #tpu.memory_space<vmem>>, vector<128x128xf32>
    %c0_5 = arith.constant 0 : index
    %c128 = arith.constant 128 : index
    %3 = vector.load %arg3[%c0_5, %c128] : memref<128x256xf32, #tpu.memory_space<vmem>>, vector<128x128xf32>
    %cst = arith.constant dense<0.000000e+00> : vector<8x128xf32>
    %4 = tpu.matmul %0, %1, %cst {dimension_numbers = #tpu.dot_dimension_numbers<[1], [0], [0], [1], [0, 0, 1, 1], [], []>} : vector<8x16xf32>, vector<16x128xf32>, vector<8x128xf32> -> vector<8x128xf32>
    %c0_6 = arith.constant 0 : index
    %c0_7 = arith.constant 0 : index
    %5 = vector.load %arg4[%c0_6, %c0_7] : memref<3x128xf32, #tpu.memory_space<vmem>>, vector<1x128xf32>
    %6 = vector.broadcast %5 : vector<1x128xf32> to vector<8x128xf32>
    %7 = arith.addf %4, %6 : vector<8x128xf32>
    %cst_8 = arith.constant 0.000000e+00 : f32
    %8 = vector.broadcast %cst_8 : f32 to vector<8x128xf32>
    %9 = arith.maximumf %7, %8 : vector<8x128xf32>
    %cst_9 = arith.constant dense<0.000000e+00> : vector<8x128xf32>
    %10 = tpu.matmul %9, %2, %cst_9 {dimension_numbers = #tpu.dot_dimension_numbers<[1], [0], [0], [1], [0, 0, 1, 1], [], []>} : vector<8x128xf32>, vector<128x128xf32>, vector<8x128xf32> -> vector<8x128xf32>
    %c1 = arith.constant 1 : index
    %c0_10 = arith.constant 0 : index
    %11 = vector.load %arg4[%c1, %c0_10] : memref<3x128xf32, #tpu.memory_space<vmem>>, vector<1x128xf32>
    %12 = vector.broadcast %11 : vector<1x128xf32> to vector<8x128xf32>
    %13 = arith.addf %10, %12 : vector<8x128xf32>
    %cst_11 = arith.constant 0.000000e+00 : f32
    %14 = vector.broadcast %cst_11 : f32 to vector<8x128xf32>
    %15 = arith.maximumf %13, %14 : vector<8x128xf32>
    %cst_12 = arith.constant dense<0.000000e+00> : vector<8x128xf32>
    %16 = tpu.matmul %15, %3, %cst_12 {dimension_numbers = #tpu.dot_dimension_numbers<[1], [0], [0], [1], [0, 0, 1, 1], [], []>} : vector<8x128xf32>, vector<128x128xf32>, vector<8x128xf32> -> vector<8x128xf32>
    %c2 = arith.constant 2 : index
    %c0_13 = arith.constant 0 : index
    %17 = vector.load %arg4[%c2, %c0_13] : memref<3x128xf32, #tpu.memory_space<vmem>>, vector<1x128xf32>
    %18 = vector.broadcast %17 : vector<1x128xf32> to vector<8x128xf32>
    %19 = arith.addf %16, %18 : vector<8x128xf32>
    %c0_14 = arith.constant 0 : index
    %c0_15 = arith.constant 0 : index
    %20 = vector.load %arg5[%c0_14, %c0_15] : memref<8x128xf32, #tpu.memory_space<vmem>>, vector<8x128xf32>
    tpu.vector_store %arg5[%c0_14, %c0_15], %19 {strides = array<i32>} : memref<8x128xf32, #tpu.memory_space<vmem>>, vector<8x128xf32>,
    return
  }
  func.func @transform_0(%arg0: i32) -> (i32, i32) {
    %c0_i32 = arith.constant 0 : i32
    %c0_i32_0 = arith.constant 0 : i32
    return %arg0, %c0_i32 : i32, i32
  }
  func.func @transform_1(%arg0: i32) -> (i32, i32) {
    %c0_i32 = arith.constant 0 : i32
    %c0_i32_0 = arith.constant 0 : i32
    %c0_i32_1 = arith.constant 0 : i32
    return %c0_i32, %c0_i32_0 : i32, i32
  }
  func.func @transform_2(%arg0: i32) -> (i32, i32) {
    %c0_i32 = arith.constant 0 : i32
    %c0_i32_0 = arith.constant 0 : i32
    %c0_i32_1 = arith.constant 0 : i32
    return %c0_i32, %c0_i32_0 : i32, i32
  }
  func.func @transform_3(%arg0: i32) -> (i32, i32) {
    %c0_i32 = arith.constant 0 : i32
    %c0_i32_0 = arith.constant 0 : i32
    %c0_i32_1 = arith.constant 0 : i32
    return %c0_i32, %c0_i32_0 : i32, i32
  }
  func.func @transform_4(%arg0: i32) -> (i32, i32) {
    %c0_i32 = arith.constant 0 : i32
    %c0_i32_0 = arith.constant 0 : i32
    return %arg0, %c0_i32 : i32, i32
  }
}

</mosaic_0001>

<llo_original>
// kernel: tpu_custom_call.1
$region0: #{tpu_custom_call.1}
  #allocation0 [shape = 'u32[]', space=smem, size = 0x4, offset = 0x4, fixed_abs, tag = 'smem constant byte address 0x4 - core index']
  #allocation1 [shape = 'u32[144,128]{1,0:T(1,128)}', space=vmem, size = 0x12000, scoped, tag = 'internal scratch']
  %s0 = inlined_call_operand.hbm [shape: f32[8,16], index: 0, kind: input, shape index: {}]
  %s1 = inlined_call_operand.hbm [shape: f32[16,128], index: 1, kind: input, shape index: {}]
  %s2 = inlined_call_operand.hbm [shape: f32[128,256], index: 2, kind: input, shape index: {}]
  %s3 = inlined_call_operand.vmem [shape: f32[3,128], index: 3, kind: input, shape index: {}]
  %s4 = inlined_call_operand.hbm [shape: f32[8,128], index: 4, kind: output, shape index: {}]
  %s5 = sld [smem:[#allocation0]]
  $region38: #{tpu_custom_call.1} parent=0
    _
  %s7 = ssub.s32 1, %s5
  %s8 = scalar_select 0, %s7, %s5
  $region1: #{tpu_custom_call.1} parent=0
    #allocation2 [shape = 'u8[4096]{0}', space=vmem, size = 0x1000, scoped, tag = 'input window, operand 0, single buffered']
    #allocation3 [shape = 's32[1]{0}', space=sflag, size = 0x4, scoped, tag = 'scoped memory for tpu_custom_call.1']
    #allocation4 [shape = 's32[1]{0}', space=sflag, size = 0x4, scoped, tag = 'scoped memory for tpu_custom_call.1']
    #allocation5 [shape = 'u8[8192]{0}', space=vmem, size = 0x2000, scoped, tag = 'input window, operand 1, single buffered']
    #allocation6 [shape = 's32[1]{0}', space=sflag, size = 0x4, scoped, tag = 'scoped memory for tpu_custom_call.1']
    #allocation7 [shape = 'u8[131072]{0}', space=vmem, size = 0x20000, scoped, tag = 'input window, operand 2, single buffered']
    #allocation8 [shape = 'u8[4096]{0}', space=vmem, size = 0x1000, scoped, tag = 'output window, operand 0, single buffered']
    %9 = vsyncpa [#allocation3], 0
    %10 = vsyncpa [#allocation6], 0
    %11 = vsyncpa [#allocation4], 0
    // Predicated region
    $region2: #{tpu_custom_call.1} parent=1 // pred_check
      _
    $region3: #{tpu_custom_call.1} parent=1 // pred_check_branch
      %13 = sbr.rel (0) target = $region5
    $region4: #{tpu_custom_call.1} parent=1 // pred_region
      %s15 = ssub.s32 128, 128
      %16 = vsyncadd [#allocation3], %s15
      %s18 = sshll.u32 [#allocation2], 4
      %s19 = int_to_ptr.vmem [resolvable:$true] %s18
      %21 = dma.hbm_to_vmem [thread:$0]  %s0, 128, %s19, [#allocation3]
    $region5: #{tpu_custom_call.1} parent=1 // pred_fallthru
      _
    // Predicated region
    $region6: #{tpu_custom_call.1} parent=1 // pred_check
      _
    $region7: #{tpu_custom_call.1} parent=1 // pred_check_branch
      %23 = sbr.rel (0) target = $region9
    $region8: #{tpu_custom_call.1} parent=1 // pred_region
      %s25 = ssub.s32 256, 256
      %26 = vsyncadd [#allocation6], %s25
      %s27 = sshll.u32 [#allocation5], 4
      %s28 = int_to_ptr.vmem [resolvable:$true] %s27
      %33 = dma.hbm_to_vmem [thread:$0]  %s1, 256, %s28, [#allocation6], 128, 128, 8
    $region9: #{tpu_custom_call.1} parent=1 // pred_fallthru
      _
    // Predicated region
    $region10: #{tpu_custom_call.1} parent=1 // pred_check
      _
    $region11: #{tpu_custom_call.1} parent=1 // pred_check_branch
      %35 = sbr.rel (0) target = $region13
    $region12: #{tpu_custom_call.1} parent=1 // pred_region
      %s37 = ssub.s32 4096, 4096
      %38 = vsyncadd [#allocation6], %s37
      %s39 = sshll.u32 [#allocation7], 4
      %s40 = int_to_ptr.vmem [resolvable:$true] %s39
      %45 = dma.hbm_to_vmem [thread:$0]  %s2, 4096, %s40, [#allocation6], 256, 256, 16
    $region13: #{tpu_custom_call.1} parent=1 // pred_fallthru
      _
    // Predicated region
    $region14: #{tpu_custom_call.1} parent=1 // pred_check
      _
    $region15: #{tpu_custom_call.1} parent=1 // pred_check_branch
      %47 = sbr.rel (0) target = $region17
    $region16: #{tpu_custom_call.1} parent=1 // pred_region
      _
    $region17: #{tpu_custom_call.1} parent=1 // pred_fallthru
      _
    // Predicated region
    $region18: #{tpu_custom_call.1} parent=1 // pred_check
      _
    $region19: #{tpu_custom_call.1} parent=1 // pred_check_branch
      %49 = sbr.rel (0) target = $region21
    $region20: #{tpu_custom_call.1} parent=1 // pred_region
      %50 = dma.done [#allocation3], 128
    $region21: #{tpu_custom_call.1} parent=1 // pred_fallthru
      _
    // Predicated region
    $region22: #{tpu_custom_call.1} parent=1 // pred_check
      _
    $region23: #{tpu_custom_call.1} parent=1 // pred_check_branch
      %52 = sbr.rel (0) target = $region25
    $region24: #{tpu_custom_call.1} parent=1 // pred_region
      %53 = dma.done [#allocation6], 256
    $region25: #{tpu_custom_call.1} parent=1 // pred_fallthru
      _
    // Predicated region
    $region26: #{tpu_custom_call.1} parent=1 // pred_check
      _
    $region27: #{tpu_custom_call.1} parent=1 // pred_check_branch
      %55 = sbr.rel (0) target = $region29
    $region28: #{tpu_custom_call.1} parent=1 // pred_region
      %56 = dma.done [#allocation6], 4096
    $region29: #{tpu_custom_call.1} parent=1 // pred_fallthru
      _
    %v57 = vld [vmem:[#allocation2] sm:$0xff]
    %v58 = vld [vmem:[#allocation5] sm:$0xff]
    %v59 = vld [vmem:[#allocation5 + $0x8] sm:$0xff]
    %v60 = vld [vmem:[#allocation7] sm:$0xff]
    %v61 = vld [vmem:[#allocation7 + $0x10] sm:$0xff]
    %v62 = vld [vmem:[#allocation7 + $0x20] sm:$0xff]
    %v63 = vld [vmem:[#allocation7 + $0x30] sm:$0xff]
    %v64 = vld [vmem:[#allocation7 + $0x40] sm:$0xff]
    %v65 = vld [vmem:[#allocation7 + $0x50] sm:$0xff]
    %v66 = vld [vmem:[#allocation7 + $0x60] sm:$0xff]
    %v67 = vld [vmem:[#allocation7 + $0x70] sm:$0xff]
    %v68 = vld [vmem:[#allocation7 + $0x80] sm:$0xff]
    %v69 = vld [vmem:[#allocation7 + $0x90] sm:$0xff]
    %v70 = vld [vmem:[#allocation7 + $0xa0] sm:$0xff]
    %v71 = vld [vmem:[#allocation7 + $0xb0] sm:$0xff]
    %v72 = vld [vmem:[#allocation7 + $0xc0] sm:$0xff]
    %v73 = vld [vmem:[#allocation7 + $0xd0] sm:$0xff]
    %v74 = vld [vmem:[#allocation7 + $0xe0] sm:$0xff]
    %v75 = vld [vmem:[#allocation7 + $0xf0] sm:$0xff]
    %v76 = vld [vmem:[#allocation7 + $0x8] sm:$0xff]
    %v77 = vld [vmem:[#allocation7 + $0x18] sm:$0xff]
    %v78 = vld [vmem:[#allocation7 + $0x28] sm:$0xff]
    %v79 = vld [vmem:[#allocation7 + $0x38] sm:$0xff]
    %v80 = vld [vmem:[#allocation7 + $0x48] sm:$0xff]
    %v81 = vld [vmem:[#allocation7 + $0x58] sm:$0xff]
    %v82 = vld [vmem:[#allocation7 + $0x68] sm:$0xff]
    %v83 = vld [vmem:[#allocation7 + $0x78] sm:$0xff]
    %v84 = vld [vmem:[#allocation7 + $0x88] sm:$0xff]
    %v85 = vld [vmem:[#allocation7 + $0x98] sm:$0xff]
    %v86 = vld [vmem:[#allocation7 + $0xa8] sm:$0xff]
    %v87 = vld [vmem:[#allocation7 + $0xb8] sm:$0xff]
    %v88 = vld [vmem:[#allocation7 + $0xc8] sm:$0xff]
    %v89 = vld [vmem:[#allocation7 + $0xd8] sm:$0xff]
    %v90 = vld [vmem:[#allocation7 + $0xe8] sm:$0xff]
    %v91 = vld [vmem:[#allocation7 + $0xf8] sm:$0xff]
    %v92 = vld [vmem:[%s3] sm:$0x1]
    %v93 = vlaneseq
    %v94 = vshrl.u32 %v93, 7
    %v95 = vsub.s32 0, %v94
    %v96 = vrot.slane %v92, %v95
    %vm97 = vcmask 130048
    %v99 = vsel %vm97, %v57, 0
    %101 = vmatprep.subr.mxu0 0.0
    %102 = vmatpush1.msra.mxu0 %v58
    %103 = vmatprep.subr.mxu0 0.0
    %104 = vmatpush1.msra.mxu0 %v59
    %105 = vmatprep.subr.mxu0 0.0
    %106 = vmatpush1.msra.mxu0 0.0
    %107 = vmatprep.subr.mxu0 0.0
    %108 = vmatpush1.msra.mxu0 0.0
    %109 = vmatprep.subr.mxu0 0.0
    %110 = vmatpush1.msra.mxu0 0.0
    %111 = vmatprep.subr.mxu0 0.0
    %112 = vmatpush1.msra.mxu0 0.0
    %113 = vmatprep.subr.mxu0 0.0
    %114 = vmatpush1.msra.mxu0 0.0
    %115 = vmatprep.subr.mxu0 0.0
    %116 = vmatpush1.msra.mxu0 0.0
    %117 = vmatprep.subr.mxu0 0.0
    %118 = vmatpush1.msra.mxu0 0.0
    %119 = vmatprep.subr.mxu0 0.0
    %120 = vmatpush1.msra.mxu0 0.0
    %121 = vmatprep.subr.mxu0 0.0
    %122 = vmatpush1.msra.mxu0 0.0
    %123 = vmatprep.subr.mxu0 0.0
    %124 = vmatpush1.msra.mxu0 0.0
    %125 = vmatprep.subr.mxu0 0.0
    %126 = vmatpush1.msra.mxu0 0.0
    %127 = vmatprep.subr.mxu0 0.0
    %128 = vmatpush1.msra.mxu0 0.0
    %129 = vmatprep.subr.mxu0 0.0
    %130 = vmatpush1.msra.mxu0 0.0
    %131 = vmatprep.subr.mxu0 0.0
    %132 = vmatpush1.msra.mxu0 0.0
    %133 = vmatprep.subr.mxu0 0.0
    %134 = vmatpush1.msra.mxu0 0.0
    %135 = vmatprep.subr.mxu0 0.0
    %136 = vmatpush1.msra.mxu0 0.0
    %137 = vmatprep.subr.mxu0 0.0
    %138 = vmatpush1.msra.mxu0 0.0
    %139 = vmatprep.subr.mxu0 0.0
    %140 = vmatpush1.msra.mxu0 0.0
    %141 = vmatprep.subr.mxu0 0.0
    %142 = vmatpush1.msra.mxu0 0.0
    %143 = vmatprep.subr.mxu0 0.0
    %144 = vmatpush1.msra.mxu0 0.0
    %145 = vmatprep.subr.mxu0 0.0
    %146 = vmatpush1.msra.mxu0 0.0
    %147 = vmatprep.subr.mxu0 0.0
    %148 = vmatpush1.msra.mxu0 0.0
    %149 = vmatprep.subr.mxu0 0.0
    %150 = vmatpush1.msra.mxu0 0.0
    %151 = vmatprep.subr.mxu0 0.0
    %152 = vmatpush1.msra.mxu0 0.0
    %153 = vmatprep.subr.mxu0 0.0
    %154 = vmatpush1.msra.mxu0 0.0
    %155 = vmatprep.subr.mxu0 0.0
    %156 = vmatpush1.msra.mxu0 0.0
    %157 = vmatprep.subr.mxu0 0.0
    %158 = vmatpush1.msra.mxu0 0.0
    %159 = vmatprep.subr.mxu0 0.0
    %160 = vmatpush1.msra.mxu0 0.0
    %161 = vmatprep.subr.mxu0 0.0
    %162 = vmatpush1.msra.mxu0 0.0
    %163 = vmatprep.subr.mxu0 0.0
    %164 = vmatpush1.msra.mxu0 0.0
    %165 = vmatprep.mubr.f32.mxu0 0.0
    %166 = vmatmul.mubr.f32.gmra.mrb[0].mxu0 %v99
    %v167 = vpop.f32.mrb[0].mxu0
    %v168 = vadd.f32 %v96, %v167
    %v169 = vpop.f32.mrb[0].mxu0
    %170 = vdwg.mxu0
    %v171 = vmax.f32 %v168, 0.0
    %v172 = vld [vmem:[%s3 + $0x1] sm:$0x1]
    %v173 = vlaneseq
    %v174 = vshrl.u32 %v173, 7
    %v175 = vsub.s32 0, %v174
    %v176 = vrot.slane %v172, %v175
    %177 = vmatprep.subr.mxu0 0.0
    %178 = vmatpush1.msra.mxu0 %v60
    %179 = vmatprep.subr.mxu0 0.0
    %180 = vmatpush1.msra.mxu0 %v61
    %181 = vmatprep.subr.mxu0 0.0
    %182 = vmatpush1.msra.mxu0 %v62
    %183 = vmatprep.subr.mxu0 0.0
    %184 = vmatpush1.msra.mxu0 %v63
    %185 = vmatprep.subr.mxu0 0.0
    %186 = vmatpush1.msra.mxu0 %v64
    %187 = vmatprep.subr.mxu0 0.0
    %188 = vmatpush1.msra.mxu0 %v65
    %189 = vmatprep.subr.mxu0 0.0
    %190 = vmatpush1.msra.mxu0 %v66
    %191 = vmatprep.subr.mxu0 0.0
    %192 = vmatpush1.msra.mxu0 %v67
    %193 = vmatprep.subr.mxu0 0.0
    %194 = vmatpush1.msra.mxu0 %v68
    %195 = vmatprep.subr.mxu0 0.0
    %196 = vmatpush1.msra.mxu0 %v69
    %197 = vmatprep.subr.mxu0 0.0
    %198 = vmatpush1.msra.mxu0 %v70
    %199 = vmatprep.subr.mxu0 0.0
    %200 = vmatpush1.msra.mxu0 %v71
    %201 = vmatprep.subr.mxu0 0.0
    %202 = vmatpush1.msra.mxu0 %v72
    %203 = vmatprep.subr.mxu0 0.0
    %204 = vmatpush1.msra.mxu0 %v73
    %205 = vmatprep.subr.mxu0 0.0
    %206 = vmatpush1.msra.mxu0 %v74
    %207 = vmatprep.subr.mxu0 0.0
    %208 = vmatpush1.msra.mxu0 %v75
    %209 = vmatprep.subr.mxu0 0.0
    %210 = vmatpush1.msra.mxu0 0.0
    %211 = vmatprep.subr.mxu0 0.0
    %212 = vmatpush1.msra.mxu0 0.0
    %213 = vmatprep.subr.mxu0 0.0
    %214 = vmatpush1.msra.mxu0 0.0
    %215 = vmatprep.subr.mxu0 0.0
    %216 = vmatpush1.msra.mxu0 0.0
    %217 = vmatprep.subr.mxu0 0.0
    %218 = vmatpush1.msra.mxu0 0.0
    %219 = vmatprep.subr.mxu0 0.0
    %220 = vmatpush1.msra.mxu0 0.0
    %221 = vmatprep.subr.mxu0 0.0
    %222 = vmatpush1.msra.mxu0 0.0
    %223 = vmatprep.subr.mxu0 0.0
    %224 = vmatpush1.msra.mxu0 0.0
    %225 = vmatprep.subr.mxu0 0.0
    %226 = vmatpush1.msra.mxu0 0.0
    %227 = vmatprep.subr.mxu0 0.0
    %228 = vmatpush1.msra.mxu0 0.0
    %229 = vmatprep.subr.mxu0 0.0
    %230 = vmatpush1.msra.mxu0 0.0
    %231 = vmatprep.subr.mxu0 0.0
    %232 = vmatpush1.msra.mxu0 0.0
    %233 = vmatprep.subr.mxu0 0.0
    %234 = vmatpush1.msra.mxu0 0.0
    %235 = vmatprep.subr.mxu0 0.0
    %236 = vmatpush1.msra.mxu0 0.0
    %237 = vmatprep.subr.mxu0 0.0
    %238 = vmatpush1.msra.mxu0 0.0
    %239 = vmatprep.subr.mxu0 0.0
    %240 = vmatpush1.msra.mxu0 0.0
    %241 = vmatprep.mubr.f32.mxu0 0.0
    %242 = vmatmul.mubr.f32.gmra.mrb[0].mxu0 %v171
    %v243 = vpop.f32.mrb[0].mxu0
    %v244 = vadd.f32 %v176, %v243
    %v245 = vpop.f32.mrb[0].mxu0
    %246 = vdwg.mxu0
    %v247 = vmax.f32 %v244, 0.0
    %v248 = vld [vmem:[%s3 + $0x2] sm:$0x1]
    %v249 = vlaneseq
    %v250 = vshrl.u32 %v249, 7
    %v251 = vsub.s32 0, %v250
    %v252 = vrot.slane %v248, %v251
    %253 = vmatprep.subr.mxu0 0.0
    %254 = vmatpush1.msra.mxu0 %v76
    %255 = vmatprep.subr.mxu0 0.0
    %256 = vmatpush1.msra.mxu0 %v77
    %257 = vmatprep.subr.mxu0 0.0
    %258 = vmatpush1.msra.mxu0 %v78
    %259 = vmatprep.subr.mxu0 0.0
    %260 = vmatpush1.msra.mxu0 %v79
    %261 = vmatprep.subr.mxu0 0.0
    %262 = vmatpush1.msra.mxu0 %v80
    %263 = vmatprep.subr.mxu0 0.0
    %264 = vmatpush1.msra.mxu0 %v81
    %265 = vmatprep.subr.mxu0 0.0
    %266 = vmatpush1.msra.mxu0 %v82
    %267 = vmatprep.subr.mxu0 0.0
    %268 = vmatpush1.msra.mxu0 %v83
    %269 = vmatprep.subr.mxu0 0.0
    %270 = vmatpush1.msra.mxu0 %v84
    %271 = vmatprep.subr.mxu0 0.0
    %272 = vmatpush1.msra.mxu0 %v85
    %273 = vmatprep.subr.mxu0 0.0
    %274 = vmatpush1.msra.mxu0 %v86
    %275 = vmatprep.subr.mxu0 0.0
    %276 = vmatpush1.msra.mxu0 %v87
    %277 = vmatprep.subr.mxu0 0.0
    %278 = vmatpush1.msra.mxu0 %v88
    %279 = vmatprep.subr.mxu0 0.0
    %280 = vmatpush1.msra.mxu0 %v89
    %281 = vmatprep.subr.mxu0 0.0
    %282 = vmatpush1.msra.mxu0 %v90
    %283 = vmatprep.subr.mxu0 0.0
    %284 = vmatpush1.msra.mxu0 %v91
    %285 = vmatprep.subr.mxu0 0.0
    %286 = vmatpush1.msra.mxu0 0.0
    %287 = vmatprep.subr.mxu0 0.0
    %288 = vmatpush1.msra.mxu0 0.0
    %289 = vmatprep.subr.mxu0 0.0
    %290 = vmatpush1.msra.mxu0 0.0
    %291 = vmatprep.subr.mxu0 0.0
    %292 = vmatpush1.msra.mxu0 0.0
    %293 = vmatprep.subr.mxu0 0.0
    %294 = vmatpush1.msra.mxu0 0.0
    %295 = vmatprep.subr.mxu0 0.0
    %296 = vmatpush1.msra.mxu0 0.0
    %297 = vmatprep.subr.mxu0 0.0
    %298 = vmatpush1.msra.mxu0 0.0
    %299 = vmatprep.subr.mxu0 0.0
    %300 = vmatpush1.msra.mxu0 0.0
    %301 = vmatprep.subr.mxu0 0.0
    %302 = vmatpush1.msra.mxu0 0.0
    %303 = vmatprep.subr.mxu0 0.0
    %304 = vmatpush1.msra.mxu0 0.0
    %305 = vmatprep.subr.mxu0 0.0
    %306 = vmatpush1.msra.mxu0 0.0
    %307 = vmatprep.subr.mxu0 0.0
    %308 = vmatpush1.msra.mxu0 0.0
    %309 = vmatprep.subr.mxu0 0.0
    %310 = vmatpush1.msra.mxu0 0.0
    %311 = vmatprep.subr.mxu0 0.0
    %312 = vmatpush1.msra.mxu0 0.0
    %313 = vmatprep.subr.mxu0 0.0
    %314 = vmatpush1.msra.mxu0 0.0
    %315 = vmatprep.subr.mxu0 0.0
    %316 = vmatpush1.msra.mxu0 0.0
    %317 = vmatprep.mubr.f32.mxu0 0.0
    %318 = vmatmul.mubr.f32.gmra.mrb[0].mxu0 %v247
    %v319 = vpop.f32.mrb[0].mxu0
    %v320 = vadd.f32 %v252, %v319
    %v321 = vpop.f32.mrb[0].mxu0
    %322 = vdwg.mxu0
    %323 = vst [vmem:[#allocation8] sm:$0xff] %v320
    // Predicated region
    $region30: #{tpu_custom_call.1} parent=1 // pred_check
      _
    $region31: #{tpu_custom_call.1} parent=1 // pred_check_branch
      %325 = sbr.rel (0) target = $region33
    $region32: #{tpu_custom_call.1} parent=1 // pred_region
      %s327 = ssub.s32 128, 128
      %328 = vsyncadd [#allocation4], %s327
      %s330 = sshll.u32 [#allocation8], 4
      %s331 = int_to_ptr.vmem [resolvable:$true] %s330
      %333 = dma.vmem_to_hbm [thread:$0]  %s331, 128, %s4, [#allocation4]
    $region33: #{tpu_custom_call.1} parent=1 // pred_fallthru
      _
    // Predicated region
    $region34: #{tpu_custom_call.1} parent=1 // pred_check
      _
    $region35: #{tpu_custom_call.1} parent=1 // pred_check_branch
      %335 = sbr.rel (0) target = $region37
    $region36: #{tpu_custom_call.1} parent=1 // pred_region
      %336 = dma.done [#allocation4], 128
    $region37: #{tpu_custom_call.1} parent=1 // pred_fallthru
      _
    %337 = vsyncpa [#allocation3], 1
    %338 = vsyncpa [#allocation6], 1
    %339 = vsyncpa [#allocation4], 1

</llo_original>
